<compile_context>
chip_gen: v7x
topology: tpu7x:2x2x1
jax: 0.10.0
libtpu: 0.0.40
codegen_flags: <defaults>
</compile_context>

<pallas_src>
import functools

import jax
import jax.numpy as jnp
from jax.experimental import pallas as pl
from jax.experimental.pallas import tpu as pltpu


_VMEM_BUDGET_BYTES = 12 * 1024 * 1024  # keeps the plan under v5e's 16 MiB scoped default


def _round_up(x, m):
    return ((x + m - 1) // m) * m


def _largest_divisor_tile(dim, cap):
    """Largest multiple of 128 that is <= min(cap, dim) and divides dim exactly.

    `dim` must be a multiple of 128 (so 128 always works).
    """
    t = min(cap, dim)
    t = max(128, (t // 128) * 128)
    while dim % t != 0:
        t -= 128
    return t


def _vmem_bytes(tm, tn, tk):
    # Double-buffered x, w, out tiles + bias, all f32.
    return 4 * (2 * tm * tk + 2 * tk * tn + 2 * tm * tn + 2 * tn)


def _choose_tiles(batch, n_pad, k_pad):
    """Pick (tm, m_pad, tn, tk) for the (M, N, K) grid.

    Strategy: one M tile covering the whole (rounded) batch when small (so W
    streams from HBM exactly once), >=2 N tiles when possible (v7x megacore),
    K tile as large as the VMEM budget allows.
    """
    m_pad8 = _round_up(batch, 8)
    tm = min(512, m_pad8)
    m_pad = _round_up(m_pad8, tm)

    tn = _largest_divisor_tile(n_pad, cap=512)
    if n_pad // tn < 2 and n_pad >= 256:
        tn = _largest_divisor_tile(n_pad, cap=n_pad // 2)

    tk = _largest_divisor_tile(k_pad, cap=1024)
    while tk > 128 and _vmem_bytes(tm, tn, tk) > _VMEM_BUDGET_BYTES:
        tk = _largest_divisor_tile(k_pad, cap=tk // 2)
    while tn > 128 and _vmem_bytes(tm, tn, tk) > _VMEM_BUDGET_BYTES:
        tn = _largest_divisor_tile(n_pad, cap=tn // 2)

    return tm, m_pad, tn, tk


def _linear_kernel(x_ref, w_ref, b_ref, o_ref):
    # x_ref: (tm, tk)  activation tile
    # w_ref: (tk, tn)  weight tile, MXU-native (K, N) layout
    # b_ref: (1,  tn)  bias tile
    # o_ref: (tm, tn)  f32 output tile, resident across the k axis (accumulator)
    k = pl.program_id(2)

    @pl.when(k == 0)
    def _():
        o_ref[...] = jnp.zeros_like(o_ref)

    o_ref[...] += jnp.dot(
        x_ref[...], w_ref[...], preferred_element_type=jnp.float32
    )

    @pl.when(k == pl.num_programs(2) - 1)
    def _():
        o_ref[...] += b_ref[...]


def prepare_lr_params(weight, bias):
    """One-time parameter prep (keep OUT of the per-call hot path).

    weight: (out_size, in_size)  PyTorch nn.Linear layout
    bias:   (out_size,)
    Returns (w_kn, b2d, out_size):
      w_kn: (k_pad, n_pad) f32 -- transposed to (in, out) and zero-padded
      b2d:  (1, n_pad)     f32 -- zero-padded bias
    """
    out_size, in_size = weight.shape
    assert bias.shape == (out_size,)
    k_pad = _round_up(in_size, 128)
    n_pad = _round_up(out_size, 128)

    w_kn = weight.T  # (in_size, out_size) = (K, N)
    if (k_pad, n_pad) != (in_size, out_size):
        w_kn = jnp.pad(w_kn, ((0, k_pad - in_size), (0, n_pad - out_size)))
    b_p = bias
    if n_pad != out_size:
        b_p = jnp.pad(bias, (0, n_pad - out_size))
    return w_kn, b_p.reshape(1, n_pad), out_size


@functools.partial(jax.jit, static_argnames=("out_size",))
def lr_forward_prepared(x, w_kn, b2d, *, out_size):
    """Pallas nn.Linear forward using pre-prepared (K,N) weight / (1,N) bias."""
    batch, in_size = x.shape
    k_pad, n_pad = w_kn.shape
    assert k_pad >= in_size and b2d.shape == (1, n_pad)
    assert x.dtype == jnp.float32  # f32 path: accumulate directly in the output

    tm, m_pad, tn, tk = _choose_tiles(batch, n_pad, k_pad)
    grid = (m_pad // tm, n_pad // tn, k_pad // tk)

    # Per-call padding of the activation only (cheap); padded K columns are
    # zero so they contribute nothing, padded M rows are sliced off below.
    x_p = x
    if (m_pad, k_pad) != (batch, in_size):
        x_p = jnp.pad(x, ((0, m_pad - batch), (0, k_pad - in_size)))

    # Deeper buffering on the dominant weight stream when the per-step matmul
    # is skinny (tiny M) and there are enough k-steps to overlap.
    w_spec_kwargs = {}
    if grid[0] == 1 and tm <= 64 and grid[2] >= 3:
        w_spec_kwargs = dict(pipeline_mode=pl.Buffered(3))
    w_spec = pl.BlockSpec((tk, tn), lambda i, j, k: (k, j), **w_spec_kwargs)

    # Advisory cost estimate, including re-streaming factors.
    cost = pl.CostEstimate(
        flops=2 * m_pad * n_pad * k_pad,
        transcendentals=0,
        bytes_accessed=4 * (
            m_pad * k_pad * (n_pad // tn)      # x re-read per N tile
            + k_pad * n_pad * (m_pad // tm)    # W re-read per M tile
            + m_pad * n_pad                    # output write
            + n_pad * (m_pad // tm)            # bias
        ),
    )

    out_padded = pl.pallas_call(
        _linear_kernel,
        out_shape=jax.ShapeDtypeStruct((m_pad, n_pad), x.dtype),
        grid_spec=pltpu.PrefetchScalarGridSpec(
            num_scalar_prefetch=0,
            grid=grid,
            in_specs=[
                pl.BlockSpec((tm, tk), lambda i, j, k: (i, k)),  # x
                w_spec,                                          # W (K, N)
                pl.BlockSpec((1, tn), lambda i, j, k: (0, j)),   # bias
            ],
            out_specs=pl.BlockSpec((tm, tn), lambda i, j, k: (i, j)),
        ),
        compiler_params=pltpu.CompilerParams(
            dimension_semantics=("parallel", "parallel", "arbitrary"),
            vmem_limit_bytes=32 * 1024 * 1024,
        ),
        cost_estimate=cost,
    )(x_p, w_kn, b2d)

    if (m_pad, n_pad) != (batch, out_size):
        out_padded = out_padded[:batch, :out_size]
    return out_padded


def lr_forward(x, weight, bias):
    """Convenience wrapper: nn.Linear(in_size, out_size).forward(x).

    For repeated calls with the same parameters, call prepare_lr_params once
    and reuse its outputs with lr_forward_prepared.
    """
    w_kn, b2d, out_size = prepare_lr_params(weight, bias)
    return lr_forward_prepared(x, w_kn, b2d, out_size=out_size)


if __name__ == "__main__":
    # Small shapes consistent with LR(in_size, out_size).
    batch, in_size, out_size = 8, 32, 16

    key = jax.random.PRNGKey(0)
    kx, kw, kb = jax.random.split(key, 3)

    x = jax.random.normal(kx, (batch, in_size), dtype=jnp.float32)
    # Deterministic synthetic parameters (PyTorch nn.Linear shapes / init range).
    bound = 1.0 / (in_size ** 0.5)
    weight = jax.random.uniform(
        kw, (out_size, in_size), minval=-bound, maxval=bound, dtype=jnp.float32
    )
    bias = jax.random.uniform(
        kb, (out_size,), minval=-bound, maxval=bound, dtype=jnp.float32
    )

    # One-time parameter prep (transpose + pad), then the hot-path forward.
    w_kn, b2d, n_out = prepare_lr_params(weight, bias)
    out = lr_forward_prepared(x, w_kn, b2d, out_size=n_out)
    out = jax.block_until_ready(out)

    # Reference check against plain JAX.
    ref = x @ weight.T + bias
    assert out.shape == (batch, out_size)
    assert jnp.allclose(out, ref, atol=1e-5, rtol=1e-5)

    print("KERNEL_OK")
</pallas_src>

<mosaic_0001>
module attributes {stable_mosaic.version = 11 : i64} {
  func.func @_linear_kernel(%arg0: i32, %arg1: i32, %arg2: i32, %arg3: memref<8x128xf32, #tpu.memory_space<vmem>>, %arg4: memref<128x128xf32, #tpu.memory_space<vmem>>, %arg5: memref<1x128xf32, #tpu.memory_space<vmem>>, %arg6: memref<8x128xf32, #tpu.memory_space<vmem>>) attributes {dimension_semantics = [#tpu.dimension_semantics<parallel>, #tpu.dimension_semantics<parallel>, #tpu.dimension_semantics<arbitrary>], iteration_bounds = array<i64: 1, 1, 1>, scalar_prefetch = 0 : i64, scratch_operands = 0 : i64, tpu.core_type = #tpu.core_type<tc>, window_params = [{transform_indices = @transform_0, window_bounds = array<i64: 8, 128>}, {transform_indices = @transform_1, window_bounds = array<i64: 128, 128>}, {transform_indices = @transform_2, window_bounds = array<i64: 1, 128>}, {transform_indices = @transform_3, window_bounds = array<i64: 8, 128>}]} {
    %c0_i32 = arith.constant 0 : i32
    %0 = arith.cmpi eq, %arg2, %c0_i32 : i32
    %1 = arith.extui %0 : i1 to i32
    %c0_i32_0 = arith.constant 0 : i32
    %2 = arith.cmpi ne, %1, %c0_i32_0 : i32
    scf.if %2 {
      %cst_10 = arith.constant 0.000000e+00 : f32
      %12 = vector.broadcast %cst_10 : f32 to vector<8x128xf32>
      %c0_11 = arith.constant 0 : index
      %c0_12 = arith.constant 0 : index
      %13 = vector.load %arg6[%c0_11, %c0_12] : memref<8x128xf32, #tpu.memory_space<vmem>>, vector<8x128xf32>
      tpu.vector_store %arg6[%c0_11, %c0_12], %12 {strides = array<i32>} : memref<8x128xf32, #tpu.memory_space<vmem>>, vector<8x128xf32>,
    } else {
    }
    %c0 = arith.constant 0 : index
    %c0_1 = arith.constant 0 : index
    %3 = vector.load %arg6[%c0, %c0_1] : memref<8x128xf32, #tpu.memory_space<vmem>>, vector<8x128xf32>
    %c0_2 = arith.constant 0 : index
    %c0_3 = arith.constant 0 : index
    %4 = vector.load %arg3[%c0_2, %c0_3] : memref<8x128xf32, #tpu.memory_space<vmem>>, vector<8x128xf32>
    %c0_4 = arith.constant 0 : index
    %c0_5 = arith.constant 0 : index
    %5 = vector.load %arg4[%c0_4, %c0_5] : memref<128x128xf32, #tpu.memory_space<vmem>>, vector<128x128xf32>
    %cst = arith.constant dense<0.000000e+00> : vector<8x128xf32>
    %6 = tpu.matmul %4, %5, %cst {dimension_numbers = #tpu.dot_dimension_numbers<[1], [0], [0], [1], [0, 0, 1, 1], [], []>} : vector<8x128xf32>, vector<128x128xf32>, vector<8x128xf32> -> vector<8x128xf32>
    %7 = arith.addf %3, %6 : vector<8x128xf32>
    %c0_6 = arith.constant 0 : index
    %c0_7 = arith.constant 0 : index
    %8 = vector.load %arg6[%c0_6, %c0_7] : memref<8x128xf32, #tpu.memory_space<vmem>>, vector<8x128xf32>
    tpu.vector_store %arg6[%c0_6, %c0_7], %7 {strides = array<i32>} : memref<8x128xf32, #tpu.memory_space<vmem>>, vector<8x128xf32>,
    %c0_i32_8 = arith.constant 0 : i32
    %9 = arith.cmpi eq, %arg2, %c0_i32_8 : i32
    %10 = arith.extui %9 : i1 to i32
    %c0_i32_9 = arith.constant 0 : i32
    %11 = arith.cmpi ne, %10, %c0_i32_9 : i32
    scf.if %11 {
      %c0_10 = arith.constant 0 : index
      %c0_11 = arith.constant 0 : index
      %12 = vector.load %arg6[%c0_10, %c0_11] : memref<8x128xf32, #tpu.memory_space<vmem>>, vector<8x128xf32>
      %c0_12 = arith.constant 0 : index
      %c0_13 = arith.constant 0 : index
      %13 = vector.load %arg5[%c0_12, %c0_13] : memref<1x128xf32, #tpu.memory_space<vmem>>, vector<1x128xf32>
      %14 = vector.broadcast %13 : vector<1x128xf32> to vector<8x128xf32>
      %15 = arith.addf %12, %14 : vector<8x128xf32>
      %c0_14 = arith.constant 0 : index
      %c0_15 = arith.constant 0 : index
      %16 = vector.load %arg6[%c0_14, %c0_15] : memref<8x128xf32, #tpu.memory_space<vmem>>, vector<8x128xf32>
      tpu.vector_store %arg6[%c0_14, %c0_15], %15 {strides = array<i32>} : memref<8x128xf32, #tpu.memory_space<vmem>>, vector<8x128xf32>,
    } else {
    }
    return
  }
  func.func @transform_0(%arg0: i32, %arg1: i32, %arg2: i32) -> (i32, i32) {
    %c0_i32 = arith.constant 0 : i32
    return %arg0, %arg2 : i32, i32
  }
  func.func @transform_1(%arg0: i32, %arg1: i32, %arg2: i32) -> (i32, i32) {
    %c0_i32 = arith.constant 0 : i32
    return %arg2, %arg1 : i32, i32
  }
  func.func @transform_2(%arg0: i32, %arg1: i32, %arg2: i32) -> (i32, i32) {
    %c0_i32 = arith.constant 0 : i32
    %c0_i32_0 = arith.constant 0 : i32
    return %c0_i32, %arg1 : i32, i32
  }
  func.func @transform_3(%arg0: i32, %arg1: i32, %arg2: i32) -> (i32, i32) {
    %c0_i32 = arith.constant 0 : i32
    return %arg0, %arg1 : i32, i32
  }
}

</mosaic_0001>

<llo_original>
// kernel: lr_forward_prepared.1
$region0: #{lr_forward_prepared.1}
  #allocation0 [shape = 'u32[]', space=smem, size = 0x4, offset = 0x4, fixed_abs, tag = 'smem constant byte address 0x4 - core index']
  #allocation1 [shape = 'u32[144,128]{1,0:T(1,128)}', space=vmem, size = 0x12000, scoped, tag = 'internal scratch']
  %s0 = inlined_call_operand.vmem [shape: f32[8,128], index: 0, kind: input, shape index: {}]
  %s1 = inlined_call_operand.hbm [shape: f32[128,128], index: 1, kind: input, shape index: {}]
  %s2 = inlined_call_operand.vmem [shape: f32[1,128], index: 2, kind: input, shape index: {}]
  %s3 = inlined_call_operand.hbm [shape: f32[8,128], index: 3, kind: output, shape index: {}]
  %s4 = sld [smem:[#allocation0]]
  $region34: #{lr_forward_prepared.1} parent=0
    _
  %s6 = ssub.s32 1, %s4
  %s7 = scalar_select 0, %s6, %s4
  $region1: #{lr_forward_prepared.1} parent=0
    #allocation2 [shape = 'u8[65536]{0}', space=vmem, size = 0x10000, scoped, tag = 'input window, operand 1, single buffered']
    #allocation3 [shape = 's32[1]{0}', space=sflag, size = 0x4, scoped, tag = 'scoped memory for lr_forward_prepared.1']
    #allocation4 [shape = 's32[1]{0}', space=sflag, size = 0x4, scoped, tag = 'scoped memory for lr_forward_prepared.1']
    #allocation5 [shape = 'u8[4096]{0}', space=vmem, size = 0x1000, scoped, tag = 'output window, operand 0, single buffered']
    %8 = vsyncpa [#allocation3], 0
    %9 = vsyncpa [#allocation4], 0
    // Predicated region
    $region2: #{lr_forward_prepared.1} parent=1 // pred_check
      _
    $region3: #{lr_forward_prepared.1} parent=1 // pred_check_branch
      %11 = sbr.rel (0) target = $region5
    $region4: #{lr_forward_prepared.1} parent=1 // pred_region
      _
    $region5: #{lr_forward_prepared.1} parent=1 // pred_fallthru
      _
    // Predicated region
    $region6: #{lr_forward_prepared.1} parent=1 // pred_check
      _
    $region7: #{lr_forward_prepared.1} parent=1 // pred_check_branch
      %13 = sbr.rel (0) target = $region9
    $region8: #{lr_forward_prepared.1} parent=1 // pred_region
      %s15 = ssub.s32 2048, 2048
      %16 = vsyncadd [#allocation3], %s15
      %s17 = sshll.u32 [#allocation2], 4
      %s18 = int_to_ptr.vmem [resolvable:$true] %s17
      %23 = dma.hbm_to_vmem [thread:$0]  %s1, 2048, %s18, [#allocation3], 128, 128, 8
    $region9: #{lr_forward_prepared.1} parent=1 // pred_fallthru
      _
    // Predicated region
    $region10: #{lr_forward_prepared.1} parent=1 // pred_check
      _
    $region11: #{lr_forward_prepared.1} parent=1 // pred_check_branch
      %25 = sbr.rel (0) target = $region13
    $region12: #{lr_forward_prepared.1} parent=1 // pred_region
      _
    $region13: #{lr_forward_prepared.1} parent=1 // pred_fallthru
      _
    // Predicated region
    $region14: #{lr_forward_prepared.1} parent=1 // pred_check
      _
    $region15: #{lr_forward_prepared.1} parent=1 // pred_check_branch
      %27 = sbr.rel (0) target = $region17
    $region16: #{lr_forward_prepared.1} parent=1 // pred_region
      %28 = dma.done [#allocation3], 2048
    $region17: #{lr_forward_prepared.1} parent=1 // pred_fallthru
      _
    %p29 = scmp.eq.s32.totalorder 0, 0
    // Predicated region
    $region18: #{lr_forward_prepared.1} parent=1 // pred_check
      %p30 = pneg %p29
    $region19: #{lr_forward_prepared.1} parent=1 // pred_check_branch
      %32 = sbr.rel (%p30) target = $region21
    $region20: #{lr_forward_prepared.1} parent=1 // pred_region
      %33 = vst [vmem:[#allocation5] sm:$0xff] 0.0
    $region21: #{lr_forward_prepared.1} parent=1 // pred_fallthru
      _
    %v34 = vld [vmem:[#allocation5] sm:$0xff]
    %v35 = vld [vmem:[%s0] sm:$0xff]
    %v36 = vld [vmem:[#allocation2] sm:$0xff]
    %v37 = vld [vmem:[#allocation2 + $0x8] sm:$0xff]
    %v38 = vld [vmem:[#allocation2 + $0x10] sm:$0xff]
    %v39 = vld [vmem:[#allocation2 + $0x18] sm:$0xff]
    %v40 = vld [vmem:[#allocation2 + $0x20] sm:$0xff]
    %v41 = vld [vmem:[#allocation2 + $0x28] sm:$0xff]
    %v42 = vld [vmem:[#allocation2 + $0x30] sm:$0xff]
    %v43 = vld [vmem:[#allocation2 + $0x38] sm:$0xff]
    %v44 = vld [vmem:[#allocation2 + $0x40] sm:$0xff]
    %v45 = vld [vmem:[#allocation2 + $0x48] sm:$0xff]
    %v46 = vld [vmem:[#allocation2 + $0x50] sm:$0xff]
    %v47 = vld [vmem:[#allocation2 + $0x58] sm:$0xff]
    %v48 = vld [vmem:[#allocation2 + $0x60] sm:$0xff]
    %v49 = vld [vmem:[#allocation2 + $0x68] sm:$0xff]
    %v50 = vld [vmem:[#allocation2 + $0x70] sm:$0xff]
    %v51 = vld [vmem:[#allocation2 + $0x78] sm:$0xff]
    %52 = vmatprep.subr.mxu0 0.0
    %53 = vmatpush1.msra.mxu0 %v36
    %54 = vmatprep.subr.mxu0 0.0
    %55 = vmatpush1.msra.mxu0 %v37
    %56 = vmatprep.subr.mxu0 0.0
    %57 = vmatpush1.msra.mxu0 %v38
    %58 = vmatprep.subr.mxu0 0.0
    %59 = vmatpush1.msra.mxu0 %v39
    %60 = vmatprep.subr.mxu0 0.0
    %61 = vmatpush1.msra.mxu0 %v40
    %62 = vmatprep.subr.mxu0 0.0
    %63 = vmatpush1.msra.mxu0 %v41
    %64 = vmatprep.subr.mxu0 0.0
    %65 = vmatpush1.msra.mxu0 %v42
    %66 = vmatprep.subr.mxu0 0.0
    %67 = vmatpush1.msra.mxu0 %v43
    %68 = vmatprep.subr.mxu0 0.0
    %69 = vmatpush1.msra.mxu0 %v44
    %70 = vmatprep.subr.mxu0 0.0
    %71 = vmatpush1.msra.mxu0 %v45
    %72 = vmatprep.subr.mxu0 0.0
    %73 = vmatpush1.msra.mxu0 %v46
    %74 = vmatprep.subr.mxu0 0.0
    %75 = vmatpush1.msra.mxu0 %v47
    %76 = vmatprep.subr.mxu0 0.0
    %77 = vmatpush1.msra.mxu0 %v48
    %78 = vmatprep.subr.mxu0 0.0
    %79 = vmatpush1.msra.mxu0 %v49
    %80 = vmatprep.subr.mxu0 0.0
    %81 = vmatpush1.msra.mxu0 %v50
    %82 = vmatprep.subr.mxu0 0.0
    %83 = vmatpush1.msra.mxu0 %v51
    %84 = vmatprep.subr.mxu0 0.0
    %85 = vmatpush1.msra.mxu0 0.0
    %86 = vmatprep.subr.mxu0 0.0
    %87 = vmatpush1.msra.mxu0 0.0
    %88 = vmatprep.subr.mxu0 0.0
    %89 = vmatpush1.msra.mxu0 0.0
    %90 = vmatprep.subr.mxu0 0.0
    %91 = vmatpush1.msra.mxu0 0.0
    %92 = vmatprep.subr.mxu0 0.0
    %93 = vmatpush1.msra.mxu0 0.0
    %94 = vmatprep.subr.mxu0 0.0
    %95 = vmatpush1.msra.mxu0 0.0
    %96 = vmatprep.subr.mxu0 0.0
    %97 = vmatpush1.msra.mxu0 0.0
    %98 = vmatprep.subr.mxu0 0.0
    %99 = vmatpush1.msra.mxu0 0.0
    %100 = vmatprep.subr.mxu0 0.0
    %101 = vmatpush1.msra.mxu0 0.0
    %102 = vmatprep.subr.mxu0 0.0
    %103 = vmatpush1.msra.mxu0 0.0
    %104 = vmatprep.subr.mxu0 0.0
    %105 = vmatpush1.msra.mxu0 0.0
    %106 = vmatprep.subr.mxu0 0.0
    %107 = vmatpush1.msra.mxu0 0.0
    %108 = vmatprep.subr.mxu0 0.0
    %109 = vmatpush1.msra.mxu0 0.0
    %110 = vmatprep.subr.mxu0 0.0
    %111 = vmatpush1.msra.mxu0 0.0
    %112 = vmatprep.subr.mxu0 0.0
    %113 = vmatpush1.msra.mxu0 0.0
    %114 = vmatprep.subr.mxu0 0.0
    %115 = vmatpush1.msra.mxu0 0.0
    %116 = vmatprep.mubr.f32.mxu0 0.0
    %117 = vmatmul.mubr.f32.gmra.mrb[0].mxu0 %v35
    %v118 = vpop.f32.mrb[0].mxu0
    %v119 = vadd.f32 0.0, %v118
    %v120 = vpop.f32.mrb[0].mxu0
    %121 = vdwg.mxu0
    %v122 = vadd.f32 %v34, %v119
    %123 = vst [vmem:[#allocation5] sm:$0xff] %v122
    // Predicated region
    $region22: #{lr_forward_prepared.1} parent=1 // pred_check
      %p124 = pneg %p29
    $region23: #{lr_forward_prepared.1} parent=1 // pred_check_branch
      %126 = sbr.rel (%p124) target = $region25
    $region24: #{lr_forward_prepared.1} parent=1 // pred_region
      %v127 = vld [vmem:[#allocation5] sm:$0xff]
      %v128 = vld [vmem:[%s2] sm:$0x1]
      %v130 = vlaneseq
      %v131 = vshrl.u32 %v130, 7
      %v132 = vsub.s32 0, %v131
      %v133 = vrot.slane %v128, %v132
      %v135 = vadd.f32 %v127, %v133
      %136 = vst [vmem:[#allocation5] sm:$0xff] %v135
    $region25: #{lr_forward_prepared.1} parent=1 // pred_fallthru
      _
    // Predicated region
    $region26: #{lr_forward_prepared.1} parent=1 // pred_check
      _
    $region27: #{lr_forward_prepared.1} parent=1 // pred_check_branch
      %138 = sbr.rel (0) target = $region29
    $region28: #{lr_forward_prepared.1} parent=1 // pred_region
      %s140 = ssub.s32 128, 128
      %141 = vsyncadd [#allocation4], %s140
      %s143 = sshll.u32 [#allocation5], 4
      %s144 = int_to_ptr.vmem [resolvable:$true] %s143
      %146 = dma.vmem_to_hbm [thread:$0]  %s144, 128, %s3, [#allocation4]
    $region29: #{lr_forward_prepared.1} parent=1 // pred_fallthru
      _
    // Predicated region
    $region30: #{lr_forward_prepared.1} parent=1 // pred_check
      _
    $region31: #{lr_forward_prepared.1} parent=1 // pred_check_branch
      %148 = sbr.rel (0) target = $region33
    $region32: #{lr_forward_prepared.1} parent=1 // pred_region
      %149 = dma.done [#allocation4], 128
    $region33: #{lr_forward_prepared.1} parent=1 // pred_fallthru
      _
    %150 = vsyncpa [#allocation3], 1
    %151 = vsyncpa [#allocation4], 1

</llo_original>
